<compile_context>
chip_gen: v7x
topology: tpu7x:2x2x1
jax: 0.10.0
libtpu: 0.0.40
codegen_flags: <defaults>
</compile_context>

<pallas_src>
import functools

import jax
import jax.numpy as jnp
from jax.experimental import pallas as pl
from jax.experimental.pallas import tpu as pltpu

# Compat shim: newer jax exposes pltpu.CompilerParams, older releases used another name.
_CompilerParams = getattr(pltpu, "CompilerParams", None) or getattr(pltpu, "TPUCompilerParams")


def _round_up(x, m):
    return (x + m - 1) // m * m


# ----------------------------------------------------------------------------- kernels
def _linear_kernel_single(x_ref, w_ref, b_ref, o_ref):
    """Whole K in one block: o = x @ w + b  (w already transposed to (K, N))."""
    o_ref[...] = (
        jnp.dot(x_ref[...], w_ref[...], preferred_element_type=jnp.float32)
        + b_ref[...]
    ).astype(o_ref.dtype)


def _linear_kernel_ksplit(x_ref, w_ref, b_ref, o_ref):
    """K split over grid axis 2: accumulate directly into the resident f32 output
    block (K-invariant out BlockSpec); bias folded into the k==0 init."""
    @pl.when(pl.program_id(2) == 0)
    def _init():
        o_ref[...] = jnp.broadcast_to(b_ref[...], o_ref.shape)

    o_ref[...] += jnp.dot(x_ref[...], w_ref[...], preferred_element_type=jnp.float32)


def linear_pallas(x, w, b, *, compute_dtype=jnp.float32, use_pallas=None):
    """F.linear(x, w, b) = x @ w.T + b with a size-heuristic Pallas/XLA dispatch."""
    B, F = x.shape
    C = w.shape[0]
    cd = jnp.dtype(compute_dtype)
    itemsize = cd.itemsize
    sub = {4: 8, 2: 16, 1: 32}[itemsize]          # packed sublane multiple per dtype

    Fp = _round_up(F, 128)                        # lane-aligned padded extents first,
    Cp = _round_up(C, 128)                        # tiles chosen as divisors below
    Bp = _round_up(B, sub)

    flops = 2.0 * Bp * Cp * Fp
    if use_pallas is None:
        # Tiny GEMM: pallas_call setup + pad/slice copies dominate; fused XLA dot wins.
        use_pallas = flops >= 4.0e6
    if not use_pallas:
        return jnp.dot(x.astype(cd), w.astype(cd).T,
                       preferred_element_type=jnp.float32) + b.astype(jnp.float32)

    # ---- tile selection (tiles divide the padded extents exactly) -------------
    if Bp > 128:
        tm = 128
        Bp = _round_up(Bp, tm)
    else:
        tm = Bp
    # Keep >=2 blocks along N when C is small so both v7x TensorCores get work.
    tn = 256 if (Cp > 512 and Cp % 256 == 0) else 128

    def _fits(tk):
        # double-buffered inputs + (conservatively double-buffered) f32 out + bias,
        # kept under every generation's scoped-VMEM default (16 MiB on v5e).
        return (2 * (tm * tk + tk * tn) * itemsize
                + 2 * tm * tn * 4 + tn * 4) <= 12 * 1024 * 1024

    tk = Fp
    if not _fits(tk):
        tk = 128                                   # always valid fallback divisor
        for cand in range(Fp - 128, 127, -128):
            if Fp % cand == 0 and _fits(cand):
                tk = cand
                break

    # ---- padding (skipped entirely when already aligned) ----------------------
    xp = x.astype(cd)
    if (Bp, Fp) != (B, F):
        xp = jnp.zeros((Bp, Fp), cd).at[:B, :F].set(xp)
    wt = w.astype(cd).T                            # transpose once in HBM -> (F, C)
    if (Fp, Cp) != (F, C):
        wt = jnp.zeros((Fp, Cp), cd).at[:F, :C].set(wt)
    bp = b.astype(jnp.float32).reshape(1, C)
    if Cp != C:
        bp = jnp.zeros((1, Cp), jnp.float32).at[:, :C].set(bp)

    cost = pl.CostEstimate(
        flops=int(flops),
        transcendentals=0,
        bytes_accessed=int(itemsize * (Bp * Fp + Fp * Cp) + 4 * (Bp * Cp + Cp)),
    )

    if tk == Fp:
        # Single-shot K: no accumulator carry, no pl.when, both axes parallel.
        out = pl.pallas_call(
            _linear_kernel_single,
            out_shape=jax.ShapeDtypeStruct((Bp, Cp), jnp.float32),
            grid_spec=pltpu.PrefetchScalarGridSpec(
                num_scalar_prefetch=0,
                grid=(Bp // tm, Cp // tn),
                in_specs=[
                    pl.BlockSpec((tm, Fp), lambda i, j: (i, 0)),   # features
                    pl.BlockSpec((Fp, tn), lambda i, j: (0, j)),   # weight^T
                    pl.BlockSpec((1, tn), lambda i, j: (0, j)),    # bias
                ],
                out_specs=pl.BlockSpec((tm, tn), lambda i, j: (i, j)),
            ),
            compiler_params=_CompilerParams(
                dimension_semantics=("parallel", "parallel")),
            cost_estimate=cost,
        )(xp, wt, bp)
    else:
        out = pl.pallas_call(
            _linear_kernel_ksplit,
            out_shape=jax.ShapeDtypeStruct((Bp, Cp), jnp.float32),
            grid_spec=pltpu.PrefetchScalarGridSpec(
                num_scalar_prefetch=0,
                grid=(Bp // tm, Cp // tn, Fp // tk),
                in_specs=[
                    pl.BlockSpec((tm, tk), lambda i, j, k: (i, k)),   # features
                    pl.BlockSpec((tk, tn), lambda i, j, k: (k, j)),   # weight^T
                    pl.BlockSpec((1, tn), lambda i, j, k: (0, j)),    # bias
                ],
                out_specs=pl.BlockSpec((tm, tn), lambda i, j, k: (i, j)),
            ),
            compiler_params=_CompilerParams(
                dimension_semantics=("parallel", "parallel", "arbitrary")),
            cost_estimate=cost,
        )(xp, wt, bp)

    if (Bp, Cp) != (B, C):
        out = out[:B, :C]
    return out


# ----------------------------------------------------------------------- plain-JAX glue
def _get_ratio(cam_weight):
    """Mirror of DetectionMix._get_ratio (RMSD/mean/mode are computed but unused in torch)."""
    f = cam_weight.shape[1]
    cam_mean = jnp.mean(cam_weight, axis=1)
    madv = jnp.sum(jnp.abs(cam_weight - cam_mean[:, None]), axis=1) / f
    cam_thrs = cam_mean + madv
    cnt = jnp.sum(cam_weight > cam_thrs[:, None], axis=1)   # per-row above-threshold counts
    return jnp.max(cnt).astype(jnp.float32) / f


def _discriminative_idx(weight, outputs, rate=None):
    """Returns (batch-row index, full descending column order, high_k[, ratio])."""
    h_x = jax.nn.softmax(outputs, axis=1)            # .squeeze() is a no-op for B > 1
    col0 = jnp.argsort(-h_x, axis=0)[:, 0]           # sort dim 0 descending, class-0 column
    cam_weight = weight[col0, :]                     # (B, F)
    ratio = _get_ratio(cam_weight) if rate is None else rate
    high_k = jnp.floor(weight.shape[1] * ratio).astype(jnp.int32)   # int(F * ratio)
    order = jnp.argsort(-cam_weight, axis=1)         # full descending order; first high_k used
    if rate is None:
        return col0, order, high_k, ratio
    return col0, order, high_k


@functools.partial(jax.jit, static_argnames=("use_pallas",))
def detection_mix_forward(weight, bias, features, features_f, output, output_f,
                          use_pallas=None):
    C, F = weight.shape
    B = features.shape[0]

    col0, order, high_k, mix_ratio = _discriminative_idx(weight, output)
    col0_f, order_f, _ = _discriminative_idx(weight, output_f, mix_ratio)

    # mask = weight.clone(); mask[idx, topk_idx] = weight[idx_f, topk_idx_f]
    # high_k is data dependent: use the full descending order + a validity mask and
    # drop out-of-range scatter entries instead of a dynamic-shape top_k.
    valid = jnp.arange(F)[None, :] < high_k                  # (1, F)
    rows = jnp.broadcast_to(col0[:, None], (B, F))
    rows = jnp.where(valid, rows, C)                         # OOB row index => dropped
    vals = weight[col0_f[:, None], order_f]                  # RHS gather (B, F)
    # TODO(synk): like torch advanced-indexing assignment, the winner is unspecified when
    # two batch rows scatter into the same (class, feature) slot.
    mask = weight.at[rows, order].set(vals, mode="drop")

    # mask_b = bias.clone(); mask_b[idx] = mask_b[idx_f]
    mask_b = bias.at[col0].set(bias[col0_f])

    out = linear_pallas(features, mask, mask_b, use_pallas=use_pallas)
    return out, mix_ratio


# ----------------------------------------------------------------------------- driver
if __name__ == "__main__":
    B, NUM_FEATURES, NUM_CLASSES = 4, 128, 8
    DROP_RATE = 0.25   # stored as self.p in the torch module but unused by forward()

    key = jax.random.PRNGKey(0)
    k1, k2, k3, k4, k5, k6 = jax.random.split(key, 6)

    weight = jax.random.normal(k1, (NUM_CLASSES, NUM_FEATURES), jnp.float32)
    bias = jax.random.normal(k2, (NUM_CLASSES,), jnp.float32)

    features = jax.random.normal(k3, (B, NUM_FEATURES), jnp.float32)
    features_f = jax.random.normal(k4, (B, NUM_FEATURES), jnp.float32)
    output = jax.random.normal(k5, (B, NUM_CLASSES), jnp.float32)
    output_f = jax.random.normal(k6, (B, NUM_CLASSES), jnp.float32)

    # Pallas-kernel path (forced so the kernel is exercised even at these toy shapes).
    out_pl, ratio_pl = detection_mix_forward(weight, bias, features, features_f,
                                             output, output_f, use_pallas=True)
    # Auto-dispatch path: the size heuristic routes this toy GEMM to a fused XLA dot.
    out_auto, ratio_auto = detection_mix_forward(weight, bias, features, features_f,
                                                 output, output_f)
    jax.block_until_ready((out_pl, ratio_pl, out_auto, ratio_auto))

    assert out_pl.shape == (B, NUM_CLASSES) and out_pl.dtype == jnp.float32
    assert ratio_pl.shape == ()
    # Loose tolerance: matmul pass decomposition may differ between the Pallas MXU
    # path and XLA's default-precision dot; a real semantics bug would be O(1) off.
    assert jnp.allclose(out_pl, out_auto, rtol=1e-2, atol=5e-2)
    assert jnp.allclose(ratio_pl, ratio_auto)
    print("KERNEL_OK")
</pallas_src>

<mosaic_0001>
module attributes {stable_mosaic.version = 11 : i64} {
  func.func @_linear_kernel_single(%arg0: i32, %arg1: i32, %arg2: memref<8x128xf32, #tpu.memory_space<vmem>>, %arg3: memref<128x128xf32, #tpu.memory_space<vmem>>, %arg4: memref<1x128xf32, #tpu.memory_space<vmem>>, %arg5: memref<8x128xf32, #tpu.memory_space<vmem>>) attributes {dimension_semantics = [#tpu.dimension_semantics<parallel>, #tpu.dimension_semantics<parallel>], iteration_bounds = array<i64: 1, 1>, scalar_prefetch = 0 : i64, scratch_operands = 0 : i64, tpu.core_type = #tpu.core_type<tc>, window_params = [{transform_indices = @transform_0, window_bounds = array<i64: 8, 128>}, {transform_indices = @transform_1, window_bounds = array<i64: 128, 128>}, {transform_indices = @transform_2, window_bounds = array<i64: 1, 128>}, {transform_indices = @transform_3, window_bounds = array<i64: 8, 128>}]} {
    %c0 = arith.constant 0 : index
    %c0_0 = arith.constant 0 : index
    %0 = vector.load %arg2[%c0, %c0_0] : memref<8x128xf32, #tpu.memory_space<vmem>>, vector<8x128xf32>
    %c0_1 = arith.constant 0 : index
    %c0_2 = arith.constant 0 : index
    %1 = vector.load %arg3[%c0_1, %c0_2] : memref<128x128xf32, #tpu.memory_space<vmem>>, vector<128x128xf32>
    %cst = arith.constant dense<0.000000e+00> : vector<8x128xf32>
    %2 = tpu.matmul %0, %1, %cst {dimension_numbers = #tpu.dot_dimension_numbers<[1], [0], [0], [1], [0, 0, 1, 1], [], []>} : vector<8x128xf32>, vector<128x128xf32>, vector<8x128xf32> -> vector<8x128xf32>
    %c0_3 = arith.constant 0 : index
    %c0_4 = arith.constant 0 : index
    %3 = vector.load %arg4[%c0_3, %c0_4] : memref<1x128xf32, #tpu.memory_space<vmem>>, vector<1x128xf32>
    %4 = vector.broadcast %3 : vector<1x128xf32> to vector<8x128xf32>
    %5 = arith.addf %2, %4 : vector<8x128xf32>
    %c0_5 = arith.constant 0 : index
    %c0_6 = arith.constant 0 : index
    %6 = vector.load %arg5[%c0_5, %c0_6] : memref<8x128xf32, #tpu.memory_space<vmem>>, vector<8x128xf32>
    tpu.vector_store %arg5[%c0_5, %c0_6], %5 {strides = array<i32>} : memref<8x128xf32, #tpu.memory_space<vmem>>, vector<8x128xf32>,
    return
  }
  func.func @transform_0(%arg0: i32, %arg1: i32) -> (i32, i32) {
    %c0_i32 = arith.constant 0 : i32
    %c0_i32_0 = arith.constant 0 : i32
    return %arg0, %c0_i32 : i32, i32
  }
  func.func @transform_1(%arg0: i32, %arg1: i32) -> (i32, i32) {
    %c0_i32 = arith.constant 0 : i32
    %c0_i32_0 = arith.constant 0 : i32
    return %c0_i32, %arg1 : i32, i32
  }
  func.func @transform_2(%arg0: i32, %arg1: i32) -> (i32, i32) {
    %c0_i32 = arith.constant 0 : i32
    %c0_i32_0 = arith.constant 0 : i32
    return %c0_i32, %arg1 : i32, i32
  }
  func.func @transform_3(%arg0: i32, %arg1: i32) -> (i32, i32) {
    %c0_i32 = arith.constant 0 : i32
    return %arg0, %arg1 : i32, i32
  }
}

</mosaic_0001>

<llo_original>
// kernel: neg.7
$region0: #{neg.7}
  #allocation0 [shape = 's32[1]{0}', space=sflag, size = 0x4, scoped, tag = 'scoped memory for neg.7']
  %s0 = inlined_call_operand.vmem [shape: f32[4,128], index: 0, kind: input, shape index: {}]
  %s1 = inlined_call_operand.vmem [shape: f32[4,128], index: 1, kind: output, shape index: {}]
  %v2 = vld [vmem:[%s0] sm:$0xf]
  %3 = xla_tuple %v2
  %4 = xla_tuple %3
  %v5 = vxor.u32 %v2, 2147483648
  %6 = xla_tuple %v5
  %7 = vst [vmem:[%s1] sm:$0xf] %v5

// kernel: detection_mix_forward.1
$region0: #{detection_mix_forward.1}
  #allocation0 [shape = 'u32[]', space=smem, size = 0x4, offset = 0x4, fixed_abs, tag = 'smem constant byte address 0x4 - core index']
  #allocation1 [shape = 'u32[144,128]{1,0:T(1,128)}', space=vmem, size = 0x12000, scoped, tag = 'internal scratch']
  %s0 = inlined_call_operand.vmem [shape: f32[8,128], index: 0, kind: input, shape index: {}]
  %s1 = inlined_call_operand.vmem [shape: f32[128,128], index: 1, kind: input, shape index: {}]
  %s2 = inlined_call_operand.vmem [shape: f32[1,128], index: 2, kind: input, shape index: {}]
  %s3 = inlined_call_operand.vmem [shape: f32[8,128], index: 3, kind: output, shape index: {}]
  %s4 = sld [smem:[#allocation0]]
  $region22: #{detection_mix_forward.1} parent=0
    _
  %s6 = ssub.s32 1, %s4
  %s7 = scalar_select 0, %s6, %s4
  // Predicated region
  $region2: #{detection_mix_forward.1} parent=0 // pred_check
    _
  $region3: #{detection_mix_forward.1} parent=0 // pred_check_branch
    %9 = sbr.rel (0) target = $region5
  $region4: #{detection_mix_forward.1} parent=0 // pred_region
    _
  $region5: #{detection_mix_forward.1} parent=0 // pred_fallthru
    _
  // Predicated region
  $region6: #{detection_mix_forward.1} parent=0 // pred_check
    _
  $region7: #{detection_mix_forward.1} parent=0 // pred_check_branch
    %11 = sbr.rel (0) target = $region9
  $region8: #{detection_mix_forward.1} parent=0 // pred_region
    _
  $region9: #{detection_mix_forward.1} parent=0 // pred_fallthru
    _
  // Predicated region
  $region10: #{detection_mix_forward.1} parent=0 // pred_check
    _
  $region11: #{detection_mix_forward.1} parent=0 // pred_check_branch
    %13 = sbr.rel (0) target = $region13
  $region12: #{detection_mix_forward.1} parent=0 // pred_region
    _
  $region13: #{detection_mix_forward.1} parent=0 // pred_fallthru
    _
  %v14 = vld [vmem:[%s0] sm:$0xff]
  %v15 = vld [vmem:[%s1] sm:$0xff]
  %v16 = vld [vmem:[%s1 + $0x8] sm:$0xff]
  %v17 = vld [vmem:[%s1 + $0x10] sm:$0xff]
  %v18 = vld [vmem:[%s1 + $0x18] sm:$0xff]
  %v19 = vld [vmem:[%s1 + $0x20] sm:$0xff]
  %v20 = vld [vmem:[%s1 + $0x28] sm:$0xff]
  %v21 = vld [vmem:[%s1 + $0x30] sm:$0xff]
  %v22 = vld [vmem:[%s1 + $0x38] sm:$0xff]
  %v23 = vld [vmem:[%s1 + $0x40] sm:$0xff]
  %v24 = vld [vmem:[%s1 + $0x48] sm:$0xff]
  %v25 = vld [vmem:[%s1 + $0x50] sm:$0xff]
  %v26 = vld [vmem:[%s1 + $0x58] sm:$0xff]
  %v27 = vld [vmem:[%s1 + $0x60] sm:$0xff]
  %v28 = vld [vmem:[%s1 + $0x68] sm:$0xff]
  %v29 = vld [vmem:[%s1 + $0x70] sm:$0xff]
  %v30 = vld [vmem:[%s1 + $0x78] sm:$0xff]
  %v31 = vld [vmem:[%s2] sm:$0x1]
  %v33 = vlaneseq
  %v34 = vshrl.u32 %v33, 7
  %v35 = vsub.s32 0, %v34
  %v36 = vrot.slane %v31, %v35
  %38 = vmatprep.subr.mxu0 0.0
  %39 = vmatpush1.msra.mxu0 %v15
  %40 = vmatprep.subr.mxu0 0.0
  %41 = vmatpush1.msra.mxu0 %v16
  %42 = vmatprep.subr.mxu0 0.0
  %43 = vmatpush1.msra.mxu0 %v17
  %44 = vmatprep.subr.mxu0 0.0
  %45 = vmatpush1.msra.mxu0 %v18
  %46 = vmatprep.subr.mxu0 0.0
  %47 = vmatpush1.msra.mxu0 %v19
  %48 = vmatprep.subr.mxu0 0.0
  %49 = vmatpush1.msra.mxu0 %v20
  %50 = vmatprep.subr.mxu0 0.0
  %51 = vmatpush1.msra.mxu0 %v21
  %52 = vmatprep.subr.mxu0 0.0
  %53 = vmatpush1.msra.mxu0 %v22
  %54 = vmatprep.subr.mxu0 0.0
  %55 = vmatpush1.msra.mxu0 %v23
  %56 = vmatprep.subr.mxu0 0.0
  %57 = vmatpush1.msra.mxu0 %v24
  %58 = vmatprep.subr.mxu0 0.0
  %59 = vmatpush1.msra.mxu0 %v25
  %60 = vmatprep.subr.mxu0 0.0
  %61 = vmatpush1.msra.mxu0 %v26
  %62 = vmatprep.subr.mxu0 0.0
  %63 = vmatpush1.msra.mxu0 %v27
  %64 = vmatprep.subr.mxu0 0.0
  %65 = vmatpush1.msra.mxu0 %v28
  %66 = vmatprep.subr.mxu0 0.0
  %67 = vmatpush1.msra.mxu0 %v29
  %68 = vmatprep.subr.mxu0 0.0
  %69 = vmatpush1.msra.mxu0 %v30
  %70 = vmatprep.subr.mxu0 0.0
  %71 = vmatpush1.msra.mxu0 0.0
  %72 = vmatprep.subr.mxu0 0.0
  %73 = vmatpush1.msra.mxu0 0.0
  %74 = vmatprep.subr.mxu0 0.0
  %75 = vmatpush1.msra.mxu0 0.0
  %76 = vmatprep.subr.mxu0 0.0
  %77 = vmatpush1.msra.mxu0 0.0
  %78 = vmatprep.subr.mxu0 0.0
  %79 = vmatpush1.msra.mxu0 0.0
  %80 = vmatprep.subr.mxu0 0.0
  %81 = vmatpush1.msra.mxu0 0.0
  %82 = vmatprep.subr.mxu0 0.0
  %83 = vmatpush1.msra.mxu0 0.0
  %84 = vmatprep.subr.mxu0 0.0
  %85 = vmatpush1.msra.mxu0 0.0
  %86 = vmatprep.subr.mxu0 0.0
  %87 = vmatpush1.msra.mxu0 0.0
  %88 = vmatprep.subr.mxu0 0.0
  %89 = vmatpush1.msra.mxu0 0.0
  %90 = vmatprep.subr.mxu0 0.0
  %91 = vmatpush1.msra.mxu0 0.0
  %92 = vmatprep.subr.mxu0 0.0
  %93 = vmatpush1.msra.mxu0 0.0
  %94 = vmatprep.subr.mxu0 0.0
  %95 = vmatpush1.msra.mxu0 0.0
  %96 = vmatprep.subr.mxu0 0.0
  %97 = vmatpush1.msra.mxu0 0.0
  %98 = vmatprep.subr.mxu0 0.0
  %99 = vmatpush1.msra.mxu0 0.0
  %100 = vmatprep.subr.mxu0 0.0
  %101 = vmatpush1.msra.mxu0 0.0
  %102 = vmatprep.mubr.f32.mxu0 0.0
  %103 = vmatmul.mubr.f32.gmra.mrb[0].mxu0 %v14
  %v104 = vpop.f32.mrb[0].mxu0
  %v105 = vadd.f32 %v36, %v104
  %v106 = vpop.f32.mrb[0].mxu0
  %107 = vdwg.mxu0
  %108 = vst [vmem:[%s3] sm:$0xff] %v105
  // Predicated region
  $region14: #{detection_mix_forward.1} parent=0 // pred_check
    _
  $region15: #{detection_mix_forward.1} parent=0 // pred_check_branch
    %110 = sbr.rel (0) target = $region17
  $region16: #{detection_mix_forward.1} parent=0 // pred_region
    _
  $region17: #{detection_mix_forward.1} parent=0 // pred_fallthru
    _
  // Predicated region
  $region18: #{detection_mix_forward.1} parent=0 // pred_check
    _
  $region19: #{detection_mix_forward.1} parent=0 // pred_check_branch
    %112 = sbr.rel (0) target = $region21
  $region20: #{detection_mix_forward.1} parent=0 // pred_region
    _
  $region21: #{detection_mix_forward.1} parent=0 // pred_fallthru
    _

</llo_original>
